<compile_context>
chip_gen: v7x
topology: tpu7x:2x2x1
jax: 0.10.0
libtpu: 0.0.40
codegen_flags: <defaults>
</compile_context>

<pallas_src>
import jax
import jax.numpy as jnp
from jax.experimental import pallas as pl
from jax.experimental.pallas import tpu as pltpu

EPS = 1e-5  # PyTorch BatchNorm2d default


def _full_spec(a):
    nd = a.ndim
    return pl.BlockSpec(a.shape, lambda i, _nd=nd: (0,) * _nd)


# -----------------------------------------------------------------------------
# Weight preprocessing (wrapper-side, tiny, runs once under jit)
# -----------------------------------------------------------------------------
def _fold_upsample2x_into_conv(w4):
    """2x nearest upsample followed by Conv(k=4, s=2, p=1) == Conv(k=3, s=1, p=1) on the
    original grid, with taps {0}, {1+2}, {3} summed along each spatial axis.
    w4: [Co, Ci, 4, 4] -> [Co, Ci, 3, 3]."""
    wh = jnp.stack([w4[:, :, 0, :], w4[:, :, 1, :] + w4[:, :, 2, :], w4[:, :, 3, :]], axis=2)
    return jnp.stack([wh[:, :, :, 0], wh[:, :, :, 1] + wh[:, :, :, 2], wh[:, :, :, 3]], axis=3)


def _band_weights(w3, S):
    """Expand a 3x3 s1 p1 conv weight [Co, Ci, 3, 3] for the row layout [N*H, W*Ci]
    (lane index = w*Ci + ci).  Returns [3*S*Ci, S*Co]; K-block dy holds the banded matrix
    band[(w_src, ci), (w, co)] = sum_dx 1{w_src == w + dx - 1} * w3[co, ci, dy, dx],
    i.e. the W shifts AND the W zero padding live in the weight."""
    Ci, Co = w3.shape[1], w3.shape[0]
    blocks = []
    for dy in range(3):
        blk = jnp.zeros((S * Ci, S * Co), jnp.float32)
        for dx in range(3):
            sel = jnp.eye(S, k=1 - dx, dtype=jnp.float32)        # w = w_src + 1 - dx
            blk = blk + jnp.kron(sel, jnp.transpose(w3[:, :, dy, dx]))
        blocks.append(blk)
    return jnp.concatenate(blocks, axis=0)
    # TODO(synk): the band is ~S/3 zeros; for large S generate it in-kernel from the compact
    # [Co,Ci,3,3] weights instead of DMAing the expanded matrix.


# -----------------------------------------------------------------------------
# Fully fused path (out_side == 2 * in_side, S a power of two): one Pallas kernel
# -----------------------------------------------------------------------------
def _fused_2x_path(x_nhwc, params):
    N, S, _, Cin = x_nhwc.shape
    Cout = params["w2"].shape[0]
    NS = N * S
    SC_in, SC_out = S * Cin, S * Cout
    M = N * S * S                              # samples per channel for the batch statistics

    # Stage-1 LHS with the three H shifts pre-concatenated along K (H zero padding included;
    # W zero padding lives in the banded weights).  Row = n*S + h, lane = w*Cin + c.
    xp = jnp.pad(x_nhwc, ((0, 0), (1, 1), (0, 0), (0, 0))).astype(jnp.float32)
    lhs1 = jnp.concatenate(
        [xp[:, dy:dy + S].reshape(NS, SC_in) for dy in range(3)], axis=1)   # [NS, 3*SC_in] f32

    # Banded bf16 weights (default MXU precision truncates operands to bf16 anyway).
    w1b = _band_weights(params["w1"].astype(jnp.float32), S).astype(jnp.bfloat16)       # [3*SC_in, SC_in]
    w2b = _band_weights(
        _fold_upsample2x_into_conv(params["w2"].astype(jnp.float32)), S
    ).astype(jnp.bfloat16)                                                               # [3*SC_in, SC_out]

    # Per-stage [gamma; beta] packs, pre-tiled to the lane layout.  Conv biases b1/b2 are
    # dropped: with batch-statistics BatchNorm a per-channel bias cancels exactly.
    def _pack(g, be, C):
        return jnp.concatenate(
            [jnp.tile(g.reshape(1, C).astype(jnp.float32), (1, S)),
             jnp.tile(be.reshape(1, C).astype(jnp.float32), (1, S))], axis=0)
    p1 = _pack(params["g1"], params["be1"], Cin)     # [2, SC_in]
    p2 = _pack(params["g2"], params["be2"], Cout)    # [2, SC_out]

    def kernel(lhs1_ref, w1_ref, w2_ref, p1_ref, p2_ref, o_ref):

        def circ(v, k):
            # static circular lane shift via slice+concat (lane shuffles; no MXU involved)
            return jnp.concatenate([v[:, k:], v[:, :k]], axis=1)

        def pool_bcast(row, C):
            # Sum the S w-positions (stride C along lanes) per channel with a log2(S)
            # shift+add tree; the result is already lane-broadcast.  Requires S power of two.
            s, shift = row, C
            while shift < S * C:
                s = s + circ(s, shift)
                shift *= 2
            return s

        def bn_silu(z, g, be, C):
            # BatchNorm2d with batch statistics (biased variance) in exact f32, folded to one
            # scale/bias FMA; SiLU's sigmoid goes to the EUP.
            inv_m = 1.0 / M
            mean = pool_bcast(jnp.sum(z, axis=0, keepdims=True), C) * inv_m
            d = z - mean
            var = pool_bcast(jnp.sum(d * d, axis=0, keepdims=True), C) * inv_m
            bn = d * (g * jax.lax.rsqrt(var + EPS)) + be
            return bn * jax.nn.sigmoid(bn)

        lhs1 = lhs1_ref[...]                                               # [NS, 3*SC_in] f32

        # ---- stage 1: Conv3x3(s1,p1) + BN + SiLU + residual (one K=192 matmul) -----------
        z1 = jnp.dot(lhs1.astype(jnp.bfloat16), w1_ref[...],
                     preferred_element_type=jnp.float32)                   # [NS, SC_in]
        y = bn_silu(z1, p1_ref[0:1, :], p1_ref[1:2, :], Cin) \
            + lhs1[:, SC_in:2 * SC_in]                   # residual x == the dy=1 K-block (f32)

        # ---- stage-2 K-blocks: H-shifted copies of y (sublane shift + H-pad edge mask) ----
        h = jax.lax.broadcasted_iota(jnp.int32, (NS, SC_in), 0) & (S - 1)  # h = row % S
        zero_row = jnp.zeros((1, SC_in), jnp.float32)
        up = jnp.where(h != 0, jnp.concatenate([zero_row, y[:NS - 1, :]], axis=0), 0.0)
        dn = jnp.where(h != S - 1, jnp.concatenate([y[1:, :], zero_row], axis=0), 0.0)
        lhs2 = jnp.concatenate([up, y, dn], axis=1).astype(jnp.bfloat16)   # [NS, 3*SC_in]

        # ---- stage 2: Upsample(2x nearest)+Conv4x4(s2,p1) folded to Conv3x3(s1,p1) --------
        z2 = jnp.dot(lhs2, w2_ref[...], preferred_element_type=jnp.float32)  # [NS, SC_out]
        o_ref[...] = bn_silu(z2, p2_ref[0:1, :], p2_ref[1:2, :], Cout)

    args = [lhs1, w1b, w2b, p1, p2]
    out = pl.pallas_call(
        kernel,
        out_shape=jax.ShapeDtypeStruct((NS, SC_out), jnp.float32),          # lane-dense store
        grid=(1,),
        in_specs=[_full_spec(a) for a in args],
        out_specs=pl.BlockSpec((NS, SC_out), lambda i: (0, 0)),
        compiler_params=pltpu.CompilerParams(dimension_semantics=("arbitrary",)),
    )(*args)
    # TODO(synk): for large batches on v7x, shard a batch grid axis ("parallel") across the two
    # TensorCores and combine the BN partial sums across cores (needs a cross-core reduction).
    # [N*S, S*Cout] -> NCHW [N, Cout, S, S]
    return jnp.transpose(out.reshape(N, S, S, Cout), (0, 3, 1, 2))


# -----------------------------------------------------------------------------
# General out_side fallback: per-stage fused conv+BN+SiLU kernels, upsample in XLA glue
# -----------------------------------------------------------------------------
def _bn_silu_cols(z, g, be):
    mean = jnp.mean(z, axis=0, keepdims=True)
    var = jnp.mean((z - mean) ** 2, axis=0, keepdims=True)       # biased batch variance
    scale = g * jax.lax.rsqrt(var + EPS)
    bias = be - mean * scale
    bn = z * scale + bias
    return bn * jax.nn.sigmoid(bn)


def _cbs_kernel(p_ref, w_ref, b_ref, g_ref, be_ref, o_ref):
    z = jnp.dot(p_ref[...], w_ref[...], preferred_element_type=jnp.float32) + b_ref[...]
    o_ref[...] = _bn_silu_cols(z, g_ref[...], be_ref[...])


def _cbs_res_kernel(p_ref, w_ref, b_ref, g_ref, be_ref, o_ref):
    p = p_ref[...]
    c = p.shape[1] // 9                        # 3x3 patches: center tap == the input pixel
    z = jnp.dot(p, w_ref[...], preferred_element_type=jnp.float32) + b_ref[...]
    o_ref[...] = _bn_silu_cols(z, g_ref[...], be_ref[...]) + p[:, 4 * c:5 * c]


def _run_cbs(kernel, patches, w, b, g, be):
    # TODO(synk): tile the row dimension (with a two-pass / partial-sum BN-stat combine) for
    # large inputs; the whole im2col matrix is loaded as one block here (demo sizes only).
    assert patches.size * 4 < 16 * 1024 * 1024, "general-path im2col block too large for VMEM"
    args = [patches, w, b, g, be]
    return pl.pallas_call(
        kernel,
        out_shape=jax.ShapeDtypeStruct((patches.shape[0], w.shape[1]), jnp.float32),
        grid=(1,),
        in_specs=[_full_spec(a) for a in args],
        out_specs=pl.BlockSpec((patches.shape[0], w.shape[1]), lambda i: (0, 0)),
        compiler_params=pltpu.CompilerParams(dimension_semantics=("arbitrary",),
                                             vmem_limit_bytes=32 * 1024 * 1024),
    )(*args)


def _im2col_nhwc(x, kh, kw, stride, pad):
    N, H, W, C = x.shape
    xp = jnp.pad(x, ((0, 0), (pad, pad), (pad, pad), (0, 0)))
    oh = (H + 2 * pad - kh) // stride + 1
    ow = (W + 2 * pad - kw) // stride + 1
    cols = [xp[:, dy:dy + oh * stride:stride, dx:dx + ow * stride:stride, :]
            for dy in range(kh) for dx in range(kw)]
    pat = jnp.stack(cols, axis=3)                               # [N, oh, ow, kh*kw, C]
    return pat.reshape(N * oh * ow, kh * kw * C), (oh, ow)


def _reshape_weight(w):                                          # [Co,Ci,kh,kw] -> [kh*kw*Ci, Co]
    co, ci, kh, kw = w.shape
    return jnp.transpose(w, (2, 3, 1, 0)).reshape(kh * kw * ci, co).astype(jnp.float32)


def _general_path(x_nhwc, params, out_side):
    # TODO(synk): non-2x nearest upsample keeps upsample/im2col as XLA glue between the two
    # per-stage fused Pallas kernels; only the exact-2x case uses the fully fused kernel.
    N, H, W, Cin = x_nhwc.shape
    Cout = params["w2"].shape[0]
    p1, (oh, ow) = _im2col_nhwc(x_nhwc, 3, 3, 1, 1)
    y = _run_cbs(_cbs_res_kernel, p1, _reshape_weight(params["w1"]),
                 params["b1"].reshape(1, Cin), params["g1"].reshape(1, Cin),
                 params["be1"].reshape(1, Cin))
    y = y.reshape(N, oh, ow, Cin)
    ridx = (jnp.arange(out_side) * oh) // out_side               # PyTorch nearest: floor(dst*in/out)
    cidx = (jnp.arange(out_side) * ow) // out_side
    yu = jnp.take(jnp.take(y, ridx, axis=1), cidx, axis=2)
    p2, (oh2, ow2) = _im2col_nhwc(yu, 4, 4, 2, 1)
    z = _run_cbs(_cbs_kernel, p2, _reshape_weight(params["w2"]),
                 params["b2"].reshape(1, Cout), params["g2"].reshape(1, Cout),
                 params["be2"].reshape(1, Cout))
    return jnp.transpose(z.reshape(N, oh2, ow2, Cout), (0, 3, 1, 2))


# -----------------------------------------------------------------------------
# Public wrapper (NCHW in / NCHW out, PyTorch convention)
# -----------------------------------------------------------------------------
def conv2d_upsample_block(x_nchw, params, out_side):
    x = jnp.transpose(x_nchw, (0, 2, 3, 1)).astype(jnp.float32)  # NHWC
    N, H, W, Cin = x.shape
    assert H == W, "square inputs expected (in_side)"
    if out_side == 2 * H and (H & (H - 1)) == 0 and N * H >= 8:
        return _fused_2x_path(x, params)
    return _general_path(x, params, out_side)


# -----------------------------------------------------------------------------
# Pure-JAX reference (ground-truth proxy for the PyTorch module, f32/HIGHEST)
# -----------------------------------------------------------------------------
def reference(x, params, out_side):
    def conv(inp, w, b, stride, pad):
        out = jax.lax.conv_general_dilated(
            inp, w, (stride, stride), ((pad, pad), (pad, pad)),
            dimension_numbers=("NCHW", "OIHW", "NCHW"),
            precision=jax.lax.Precision.HIGHEST)
        return out + b.reshape(1, -1, 1, 1)

    def bn(inp, g, be):
        mean = jnp.mean(inp, axis=(0, 2, 3), keepdims=True)
        var = jnp.mean((inp - mean) ** 2, axis=(0, 2, 3), keepdims=True)
        return (inp - mean) * jax.lax.rsqrt(var + EPS) * g.reshape(1, -1, 1, 1) \
            + be.reshape(1, -1, 1, 1)

    def silu(v):
        return v * jax.nn.sigmoid(v)

    r = silu(bn(conv(x, params["w1"], params["b1"].reshape(-1), 1, 1),
                params["g1"].reshape(-1), params["be1"].reshape(-1)))
    y = r + x
    N, C, H, W = y.shape
    ridx = (jnp.arange(out_side) * H) // out_side
    cidx = (jnp.arange(out_side) * W) // out_side
    y = jnp.take(jnp.take(y, ridx, axis=2), cidx, axis=3)
    return silu(bn(conv(y, params["w2"], params["b2"].reshape(-1), 2, 1),
                   params["g2"].reshape(-1), params["be2"].reshape(-1)))


# -----------------------------------------------------------------------------
if __name__ == "__main__":
    # Module config: in_chans=4, in_side=16, out_chans=8, out_side=32 (= 2*in_side),
    # so the single fused kernel runs with a 128-lane-dense output block.
    batch, in_chans, in_side = 2, 4, 16
    out_chans, out_side = 8, 32

    key = jax.random.PRNGKey(0)
    k = jax.random.split(key, 9)
    params = {
        # residual: Conv2d(in_chans, in_chans, 3, 1, 1) + BatchNorm2d(in_chans)
        "w1": 0.1 * jax.random.normal(k[0], (in_chans, in_chans, 3, 3), jnp.float32),
        "b1": 0.1 * jax.random.normal(k[1], (1, in_chans), jnp.float32),
        "g1": 1.0 + 0.1 * jax.random.normal(k[2], (1, in_chans), jnp.float32),
        "be1": 0.1 * jax.random.normal(k[3], (1, in_chans), jnp.float32),
        # upsample: Upsample(out_side) + Conv2d(in_chans, out_chans, 4, 2, 1) + BatchNorm2d
        "w2": 0.1 * jax.random.normal(k[4], (out_chans, in_chans, 4, 4), jnp.float32),
        "b2": 0.1 * jax.random.normal(k[5], (1, out_chans), jnp.float32),
        "g2": 1.0 + 0.1 * jax.random.normal(k[6], (1, out_chans), jnp.float32),
        "be2": 0.1 * jax.random.normal(k[7], (1, out_chans), jnp.float32),
    }
    x = jax.random.normal(k[8], (batch, in_chans, in_side, in_side), jnp.float32)

    fwd = jax.jit(conv2d_upsample_block, static_argnums=2)

    # fused single-kernel path (out_side == 2*in_side)
    out = jax.block_until_ready(fwd(x, params, out_side))
    ref = jax.block_until_ready(reference(x, params, out_side))
    assert out.shape == ref.shape, (out.shape, ref.shape)
    # default (single-pass bf16) MXU precision vs. the HIGHEST-precision f32 reference
    assert jnp.allclose(out, ref, atol=5e-2, rtol=5e-2), float(jnp.max(jnp.abs(out - ref)))

    # general (non-2x) fallback path keeps full module semantics
    out2 = jax.block_until_ready(fwd(x, params, 24))
    ref2 = jax.block_until_ready(reference(x, params, 24))
    assert out2.shape == ref2.shape, (out2.shape, ref2.shape)
    assert jnp.allclose(out2, ref2, atol=5e-2, rtol=5e-2), float(jnp.max(jnp.abs(out2 - ref2)))

    print("KERNEL_OK")
</pallas_src>

<mosaic_0001>
module attributes {stable_mosaic.version = 11 : i64} {
  func.func @kernel(%arg0: i32, %arg1: memref<32x192xf32, #tpu.memory_space<vmem>>, %arg2: memref<192x64xbf16, #tpu.memory_space<vmem>>, %arg3: memref<192x128xbf16, #tpu.memory_space<vmem>>, %arg4: memref<2x64xf32, #tpu.memory_space<vmem>>, %arg5: memref<2x128xf32, #tpu.memory_space<vmem>>, %arg6: memref<32x128xf32, #tpu.memory_space<vmem>>) attributes {dimension_semantics = [#tpu.dimension_semantics<arbitrary>], iteration_bounds = array<i64: 1>, scalar_prefetch = 0 : i64, scratch_operands = 0 : i64, tpu.core_type = #tpu.core_type<tc>, window_params = [{pipeline_mode = #tpu.pipeline_mode<synchronous>, transform_indices = @transform_0, window_bounds = array<i64: 32, 192>}, {pipeline_mode = #tpu.pipeline_mode<synchronous>, transform_indices = @transform_1, window_bounds = array<i64: 192, 64>}, {pipeline_mode = #tpu.pipeline_mode<synchronous>, transform_indices = @transform_2, window_bounds = array<i64: 192, 128>}, {pipeline_mode = #tpu.pipeline_mode<synchronous>, transform_indices = @transform_3, window_bounds = array<i64: 2, 64>}, {pipeline_mode = #tpu.pipeline_mode<synchronous>, transform_indices = @transform_4, window_bounds = array<i64: 2, 128>}, {pipeline_mode = #tpu.pipeline_mode<synchronous>, transform_indices = @transform_5, window_bounds = array<i64: 32, 128>}]} {
    %c0 = arith.constant 0 : index
    %c0_0 = arith.constant 0 : index
    %0 = vector.load %arg1[%c0, %c0_0] : memref<32x192xf32, #tpu.memory_space<vmem>>, vector<32x192xf32>
    %1 = arith.truncf %0 : vector<32x192xf32> to vector<32x192xbf16>
    %c0_1 = arith.constant 0 : index
    %c0_2 = arith.constant 0 : index
    %2 = vector.load %arg2[%c0_1, %c0_2] : memref<192x64xbf16, #tpu.memory_space<vmem>>, vector<192x64xbf16>
    %cst = arith.constant dense<0.000000e+00> : vector<32x64xf32>
    %3 = tpu.matmul %1, %2, %cst {dimension_numbers = #tpu.dot_dimension_numbers<[1], [0], [0], [1], [0, 0, 1, 1], [], []>} : vector<32x192xbf16>, vector<192x64xbf16>, vector<32x64xf32> -> vector<32x64xf32>
    %c0_3 = arith.constant 0 : index
    %c0_4 = arith.constant 0 : index
    %4 = vector.load %arg4[%c0_3, %c0_4] : memref<2x64xf32, #tpu.memory_space<vmem>>, vector<1x64xf32>
    %c1 = arith.constant 1 : index
    %c0_5 = arith.constant 0 : index
    %5 = vector.load %arg4[%c1, %c0_5] : memref<2x64xf32, #tpu.memory_space<vmem>>, vector<1x64xf32>
    %cst_6 = arith.constant dense<0.000000e+00> : vector<64xf32>
    %6 = vector.multi_reduction <add>, %3, %cst_6 [0] : vector<32x64xf32> to vector<64xf32>
    %7 = vector.shape_cast %6 : vector<64xf32> to vector<1x64xf32>
    %8 = vector.extract_strided_slice %7 {offsets = [0, 4], sizes = [1, 60], strides = [1, 1]} : vector<1x64xf32> to vector<1x60xf32>
    %9 = vector.extract_strided_slice %7 {offsets = [0, 0], sizes = [1, 4], strides = [1, 1]} : vector<1x64xf32> to vector<1x4xf32>
    %10 = tpu.concatenate %8, %9 in 1 : vector<1x60xf32>, vector<1x4xf32> -> vector<1x64xf32>
    %11 = arith.addf %7, %10 : vector<1x64xf32>
    %12 = vector.extract_strided_slice %11 {offsets = [0, 8], sizes = [1, 56], strides = [1, 1]} : vector<1x64xf32> to vector<1x56xf32>
    %13 = vector.extract_strided_slice %11 {offsets = [0, 0], sizes = [1, 8], strides = [1, 1]} : vector<1x64xf32> to vector<1x8xf32>
    %14 = tpu.concatenate %12, %13 in 1 : vector<1x56xf32>, vector<1x8xf32> -> vector<1x64xf32>
    %15 = arith.addf %11, %14 : vector<1x64xf32>
    %16 = vector.extract_strided_slice %15 {offsets = [0, 16], sizes = [1, 48], strides = [1, 1]} : vector<1x64xf32> to vector<1x48xf32>
    %17 = vector.extract_strided_slice %15 {offsets = [0, 0], sizes = [1, 16], strides = [1, 1]} : vector<1x64xf32> to vector<1x16xf32>
    %18 = tpu.concatenate %16, %17 in 1 : vector<1x48xf32>, vector<1x16xf32> -> vector<1x64xf32>
    %19 = arith.addf %15, %18 : vector<1x64xf32>
    %20 = vector.extract_strided_slice %19 {offsets = [0, 32], sizes = [1, 32], strides = [1, 1]} : vector<1x64xf32> to vector<1x32xf32>
    %21 = vector.extract_strided_slice %19 {offsets = [0, 0], sizes = [1, 32], strides = [1, 1]} : vector<1x64xf32> to vector<1x32xf32>
    %22 = tpu.concatenate %20, %21 in 1 : vector<1x32xf32>, vector<1x32xf32> -> vector<1x64xf32>
    %23 = arith.addf %19, %22 : vector<1x64xf32>
    %cst_7 = arith.constant 0.001953125 : f32
    %24 = vector.broadcast %cst_7 : f32 to vector<1x64xf32>
    %25 = arith.mulf %23, %24 : vector<1x64xf32>
    %26 = vector.broadcast %25 : vector<1x64xf32> to vector<32x64xf32>
    %27 = arith.subf %3, %26 : vector<32x64xf32>
    %28 = arith.mulf %27, %27 : vector<32x64xf32>
    %cst_8 = arith.constant dense<0.000000e+00> : vector<64xf32>
    %29 = vector.multi_reduction <add>, %28, %cst_8 [0] : vector<32x64xf32> to vector<64xf32>
    %30 = vector.shape_cast %29 : vector<64xf32> to vector<1x64xf32>
    %31 = vector.extract_strided_slice %30 {offsets = [0, 4], sizes = [1, 60], strides = [1, 1]} : vector<1x64xf32> to vector<1x60xf32>
    %32 = vector.extract_strided_slice %30 {offsets = [0, 0], sizes = [1, 4], strides = [1, 1]} : vector<1x64xf32> to vector<1x4xf32>
    %33 = tpu.concatenate %31, %32 in 1 : vector<1x60xf32>, vector<1x4xf32> -> vector<1x64xf32>
    %34 = arith.addf %30, %33 : vector<1x64xf32>
    %35 = vector.extract_strided_slice %34 {offsets = [0, 8], sizes = [1, 56], strides = [1, 1]} : vector<1x64xf32> to vector<1x56xf32>
    %36 = vector.extract_strided_slice %34 {offsets = [0, 0], sizes = [1, 8], strides = [1, 1]} : vector<1x64xf32> to vector<1x8xf32>
    %37 = tpu.concatenate %35, %36 in 1 : vector<1x56xf32>, vector<1x8xf32> -> vector<1x64xf32>
    %38 = arith.addf %34, %37 : vector<1x64xf32>
    %39 = vector.extract_strided_slice %38 {offsets = [0, 16], sizes = [1, 48], strides = [1, 1]} : vector<1x64xf32> to vector<1x48xf32>
    %40 = vector.extract_strided_slice %38 {offsets = [0, 0], sizes = [1, 16], strides = [1, 1]} : vector<1x64xf32> to vector<1x16xf32>
    %41 = tpu.concatenate %39, %40 in 1 : vector<1x48xf32>, vector<1x16xf32> -> vector<1x64xf32>
    %42 = arith.addf %38, %41 : vector<1x64xf32>
    %43 = vector.extract_strided_slice %42 {offsets = [0, 32], sizes = [1, 32], strides = [1, 1]} : vector<1x64xf32> to vector<1x32xf32>
    %44 = vector.extract_strided_slice %42 {offsets = [0, 0], sizes = [1, 32], strides = [1, 1]} : vector<1x64xf32> to vector<1x32xf32>
    %45 = tpu.concatenate %43, %44 in 1 : vector<1x32xf32>, vector<1x32xf32> -> vector<1x64xf32>
    %46 = arith.addf %42, %45 : vector<1x64xf32>
    %cst_9 = arith.constant 0.001953125 : f32
    %47 = vector.broadcast %cst_9 : f32 to vector<1x64xf32>
    %48 = arith.mulf %46, %47 : vector<1x64xf32>
    %cst_10 = arith.constant 9.99999974E-6 : f32
    %49 = vector.broadcast %cst_10 : f32 to vector<1x64xf32>
    %50 = arith.addf %48, %49 : vector<1x64xf32>
    %51 = math.rsqrt %50 : vector<1x64xf32>
    %52 = arith.mulf %4, %51 : vector<1x64xf32>
    %53 = vector.broadcast %52 : vector<1x64xf32> to vector<32x64xf32>
    %54 = arith.mulf %27, %53 : vector<32x64xf32>
    %55 = vector.broadcast %5 : vector<1x64xf32> to vector<32x64xf32>
    %56 = arith.addf %54, %55 : vector<32x64xf32>
    %57 = arith.negf %56 : vector<32x64xf32>
    %58 = math.exp %57 : vector<32x64xf32>
    %cst_11 = arith.constant 1.000000e+00 : f32
    %59 = vector.broadcast %cst_11 : f32 to vector<32x64xf32>
    %60 = arith.addf %59, %58 : vector<32x64xf32>
    %61 = arith.divf %59, %60 : vector<32x64xf32>
    %62 = arith.mulf %56, %61 : vector<32x64xf32>
    %63 = vector.extract_strided_slice %0 {offsets = [0, 64], sizes = [32, 64], strides = [1, 1]} : vector<32x192xf32> to vector<32x64xf32>
    %64 = arith.addf %62, %63 : vector<32x64xf32>
    %65 = tpu.iota {dimensions = array<i32: 0>} : vector<32x64xi32>
    %c15_i32 = arith.constant 15 : i32
    %66 = vector.broadcast %c15_i32 : i32 to vector<32x64xi32>
    %67 = arith.andi %65, %66 : vector<32x64xi32>
    %cst_12 = arith.constant 0.000000e+00 : f32
    %68 = vector.broadcast %cst_12 : f32 to vector<1x64xf32>
    %c0_i32 = arith.constant 0 : i32
    %69 = vector.broadcast %c0_i32 : i32 to vector<32x64xi32>
    %70 = arith.cmpi ne, %67, %69 : vector<32x64xi32>
    %71 = vector.extract_strided_slice %64 {offsets = [0, 0], sizes = [31, 64], strides = [1, 1]} : vector<32x64xf32> to vector<31x64xf32>
    %72 = tpu.concatenate %68, %71 in 0 : vector<1x64xf32>, vector<31x64xf32> -> vector<32x64xf32>
    %cst_13 = arith.constant 0.000000e+00 : f32
    %73 = vector.broadcast %cst_13 : f32 to vector<32x64xf32>
    %74 = arith.select %70, %72, %73 : vector<32x64xi1>, vector<32x64xf32>
    %c15_i32_14 = arith.constant 15 : i32
    %75 = vector.broadcast %c15_i32_14 : i32 to vector<32x64xi32>
    %76 = arith.cmpi ne, %67, %75 : vector<32x64xi32>
    %77 = vector.extract_strided_slice %64 {offsets = [1, 0], sizes = [31, 64], strides = [1, 1]} : vector<32x64xf32> to vector<31x64xf32>
    %78 = tpu.concatenate %77, %68 in 0 : vector<31x64xf32>, vector<1x64xf32> -> vector<32x64xf32>
    %cst_15 = arith.constant 0.000000e+00 : f32
    %79 = vector.broadcast %cst_15 : f32 to vector<32x64xf32>
    %80 = arith.select %76, %78, %79 : vector<32x64xi1>, vector<32x64xf32>
    %81 = tpu.concatenate %74, %64, %80 in 1 : vector<32x64xf32>, vector<32x64xf32>, vector<32x64xf32> -> vector<32x192xf32>
    %82 = arith.truncf %81 : vector<32x192xf32> to vector<32x192xbf16>
    %c0_16 = arith.constant 0 : index
    %c0_17 = arith.constant 0 : index
    %83 = vector.load %arg3[%c0_16, %c0_17] : memref<192x128xbf16, #tpu.memory_space<vmem>>, vector<192x128xbf16>
    %cst_18 = arith.constant dense<0.000000e+00> : vector<32x128xf32>
    %84 = tpu.matmul %82, %83, %cst_18 {dimension_numbers = #tpu.dot_dimension_numbers<[1], [0], [0], [1], [0, 0, 1, 1], [], []>} : vector<32x192xbf16>, vector<192x128xbf16>, vector<32x128xf32> -> vector<32x128xf32>
    %c0_19 = arith.constant 0 : index
    %c0_20 = arith.constant 0 : index
    %85 = vector.load %arg5[%c0_19, %c0_20] : memref<2x128xf32, #tpu.memory_space<vmem>>, vector<1x128xf32>
    %c1_21 = arith.constant 1 : index
    %c0_22 = arith.constant 0 : index
    %86 = vector.load %arg5[%c1_21, %c0_22] : memref<2x128xf32, #tpu.memory_space<vmem>>, vector<1x128xf32>
    %cst_23 = arith.constant dense<0.000000e+00> : vector<128xf32>
    %87 = vector.multi_reduction <add>, %84, %cst_23 [0] : vector<32x128xf32> to vector<128xf32>
    %88 = vector.shape_cast %87 : vector<128xf32> to vector<1x128xf32>
    %89 = vector.extract_strided_slice %88 {offsets = [0, 8], sizes = [1, 120], strides = [1, 1]} : vector<1x128xf32> to vector<1x120xf32>
    %90 = vector.extract_strided_slice %88 {offsets = [0, 0], sizes = [1, 8], strides = [1, 1]} : vector<1x128xf32> to vector<1x8xf32>
    %91 = tpu.concatenate %89, %90 in 1 : vector<1x120xf32>, vector<1x8xf32> -> vector<1x128xf32>
    %92 = arith.addf %88, %91 : vector<1x128xf32>
    %93 = vector.extract_strided_slice %92 {offsets = [0, 16], sizes = [1, 112], strides = [1, 1]} : vector<1x128xf32> to vector<1x112xf32>
    %94 = vector.extract_strided_slice %92 {offsets = [0, 0], sizes = [1, 16], strides = [1, 1]} : vector<1x128xf32> to vector<1x16xf32>
    %95 = tpu.concatenate %93, %94 in 1 : vector<1x112xf32>, vector<1x16xf32> -> vector<1x128xf32>
    %96 = arith.addf %92, %95 : vector<1x128xf32>
    %97 = vector.extract_strided_slice %96 {offsets = [0, 32], sizes = [1, 96], strides = [1, 1]} : vector<1x128xf32> to vector<1x96xf32>
    %98 = vector.extract_strided_slice %96 {offsets = [0, 0], sizes = [1, 32], strides = [1, 1]} : vector<1x128xf32> to vector<1x32xf32>
    %99 = tpu.concatenate %97, %98 in 1 : vector<1x96xf32>, vector<1x32xf32> -> vector<1x128xf32>
    %100 = arith.addf %96, %99 : vector<1x128xf32>
    %101 = vector.extract_strided_slice %100 {offsets = [0, 64], sizes = [1, 64], strides = [1, 1]} : vector<1x128xf32> to vector<1x64xf32>
    %102 = vector.extract_strided_slice %100 {offsets = [0, 0], sizes = [1, 64], strides = [1, 1]} : vector<1x128xf32> to vector<1x64xf32>
    %103 = tpu.concatenate %101, %102 in 1 : vector<1x64xf32>, vector<1x64xf32> -> vector<1x128xf32>
    %104 = arith.addf %100, %103 : vector<1x128xf32>
    %cst_24 = arith.constant 0.001953125 : f32
    %105 = vector.broadcast %cst_24 : f32 to vector<1x128xf32>
    %106 = arith.mulf %104, %105 : vector<1x128xf32>
    %107 = vector.broadcast %106 : vector<1x128xf32> to vector<32x128xf32>
    %108 = arith.subf %84, %107 : vector<32x128xf32>
    %109 = arith.mulf %108, %108 : vector<32x128xf32>
    %cst_25 = arith.constant dense<0.000000e+00> : vector<128xf32>
    %110 = vector.multi_reduction <add>, %109, %cst_25 [0] : vector<32x128xf32> to vector<128xf32>
    %111 = vector.shape_cast %110 : vector<128xf32> to vector<1x128xf32>
    %112 = vector.extract_strided_slice %111 {offsets = [0, 8], sizes = [1, 120], strides = [1, 1]} : vector<1x128xf32> to vector<1x120xf32>
    %113 = vector.extract_strided_slice %111 {offsets = [0, 0], sizes = [1, 8], strides = [1, 1]} : vector<1x128xf32> to vector<1x8xf32>
    %114 = tpu.concatenate %112, %113 in 1 : vector<1x120xf32>, vector<1x8xf32> -> vector<1x128xf32>
    %115 = arith.addf %111, %114 : vector<1x128xf32>
    %116 = vector.extract_strided_slice %115 {offsets = [0, 16], sizes = [1, 112], strides = [1, 1]} : vector<1x128xf32> to vector<1x112xf32>
    %117 = vector.extract_strided_slice %115 {offsets = [0, 0], sizes = [1, 16], strides = [1, 1]} : vector<1x128xf32> to vector<1x16xf32>
    %118 = tpu.concatenate %116, %117 in 1 : vector<1x112xf32>, vector<1x16xf32> -> vector<1x128xf32>
    %119 = arith.addf %115, %118 : vector<1x128xf32>
    %120 = vector.extract_strided_slice %119 {offsets = [0, 32], sizes = [1, 96], strides = [1, 1]} : vector<1x128xf32> to vector<1x96xf32>
    %121 = vector.extract_strided_slice %119 {offsets = [0, 0], sizes = [1, 32], strides = [1, 1]} : vector<1x128xf32> to vector<1x32xf32>
    %122 = tpu.concatenate %120, %121 in 1 : vector<1x96xf32>, vector<1x32xf32> -> vector<1x128xf32>
    %123 = arith.addf %119, %122 : vector<1x128xf32>
    %124 = vector.extract_strided_slice %123 {offsets = [0, 64], sizes = [1, 64], strides = [1, 1]} : vector<1x128xf32> to vector<1x64xf32>
    %125 = vector.extract_strided_slice %123 {offsets = [0, 0], sizes = [1, 64], strides = [1, 1]} : vector<1x128xf32> to vector<1x64xf32>
    %126 = tpu.concatenate %124, %125 in 1 : vector<1x64xf32>, vector<1x64xf32> -> vector<1x128xf32>
    %127 = arith.addf %123, %126 : vector<1x128xf32>
    %cst_26 = arith.constant 0.001953125 : f32
    %128 = vector.broadcast %cst_26 : f32 to vector<1x128xf32>
    %129 = arith.mulf %127, %128 : vector<1x128xf32>
    %cst_27 = arith.constant 9.99999974E-6 : f32
    %130 = vector.broadcast %cst_27 : f32 to vector<1x128xf32>
    %131 = arith.addf %129, %130 : vector<1x128xf32>
    %132 = math.rsqrt %131 : vector<1x128xf32>
    %133 = arith.mulf %85, %132 : vector<1x128xf32>
    %134 = vector.broadcast %133 : vector<1x128xf32> to vector<32x128xf32>
    %135 = arith.mulf %108, %134 : vector<32x128xf32>
    %136 = vector.broadcast %86 : vector<1x128xf32> to vector<32x128xf32>
    %137 = arith.addf %135, %136 : vector<32x128xf32>
    %138 = arith.negf %137 : vector<32x128xf32>
    %139 = math.exp %138 : vector<32x128xf32>
    %cst_28 = arith.constant 1.000000e+00 : f32
    %140 = vector.broadcast %cst_28 : f32 to vector<32x128xf32>
    %141 = arith.addf %140, %139 : vector<32x128xf32>
    %142 = arith.divf %140, %141 : vector<32x128xf32>
    %143 = arith.mulf %137, %142 : vector<32x128xf32>
    %c0_29 = arith.constant 0 : index
    %c0_30 = arith.constant 0 : index
    %144 = vector.load %arg6[%c0_29, %c0_30] : memref<32x128xf32, #tpu.memory_space<vmem>>, vector<32x128xf32>
    tpu.vector_store %arg6[%c0_29, %c0_30], %143 {strides = array<i32>} : memref<32x128xf32, #tpu.memory_space<vmem>>, vector<32x128xf32>,
    return
  }
  func.func @transform_0(%arg0: i32) -> (i32, i32) {
    %c0_i32 = arith.constant 0 : i32
    %c0_i32_0 = arith.constant 0 : i32
    %c0_i32_1 = arith.constant 0 : i32
    return %c0_i32, %c0_i32_0 : i32, i32
  }
  func.func @transform_1(%arg0: i32) -> (i32, i32) {
    %c0_i32 = arith.constant 0 : i32
    %c0_i32_0 = arith.constant 0 : i32
    %c0_i32_1 = arith.constant 0 : i32
    return %c0_i32, %c0_i32_0 : i32, i32
  }
  func.func @transform_2(%arg0: i32) -> (i32, i32) {
    %c0_i32 = arith.constant 0 : i32
    %c0_i32_0 = arith.constant 0 : i32
    %c0_i32_1 = arith.constant 0 : i32
    return %c0_i32, %c0_i32_0 : i32, i32
  }
  func.func @transform_3(%arg0: i32) -> (i32, i32) {
    %c0_i32 = arith.constant 0 : i32
    %c0_i32_0 = arith.constant 0 : i32
    %c0_i32_1 = arith.constant 0 : i32
    return %c0_i32, %c0_i32_0 : i32, i32
  }
  func.func @transform_4(%arg0: i32) -> (i32, i32) {
    %c0_i32 = arith.constant 0 : i32
    %c0_i32_0 = arith.constant 0 : i32
    %c0_i32_1 = arith.constant 0 : i32
    return %c0_i32, %c0_i32_0 : i32, i32
  }
  func.func @transform_5(%arg0: i32) -> (i32, i32) {
    %c0_i32 = arith.constant 0 : i32
    %c0_i32_0 = arith.constant 0 : i32
    %c0_i32_1 = arith.constant 0 : i32
    return %c0_i32, %c0_i32_0 : i32, i32
  }
}

</mosaic_0001>

<llo_original>
// kernel: conv2d_upsample_block.1
$region0: #{conv2d_upsample_block.1}
  #allocation0 [shape = 'u32[]', space=smem, size = 0x4, offset = 0x4, fixed_abs, tag = 'smem constant byte address 0x4 - core index']
  #allocation1 [shape = 'u32[144,128]{1,0:T(1,128)}', space=vmem, size = 0x12000, scoped, tag = 'internal scratch']
  %s0 = inlined_call_operand.vmem [shape: f32[32,192], index: 0, kind: input, shape index: {}]
  %s1 = inlined_call_operand.vmem [shape: bf16[192,64], index: 1, kind: input, shape index: {}]
  %s2 = inlined_call_operand.vmem [shape: bf16[192,128], index: 2, kind: input, shape index: {}]
  %s3 = inlined_call_operand.vmem [shape: f32[2,64], index: 3, kind: input, shape index: {}]
  %s4 = inlined_call_operand.vmem [shape: f32[2,128], index: 4, kind: input, shape index: {}]
  %s5 = inlined_call_operand.vmem [shape: f32[32,128], index: 5, kind: output, shape index: {}]
  %s6 = sld [smem:[#allocation0]]
  $region30: #{conv2d_upsample_block.1} parent=0
    _
  %s8 = ssub.s32 1, %s6
  %s9 = scalar_select 0, %s8, %s6
  // Predicated region
  $region2: #{conv2d_upsample_block.1} parent=0 // pred_check
    _
  $region3: #{conv2d_upsample_block.1} parent=0 // pred_check_branch
    %11 = sbr.rel (0) target = $region5
  $region4: #{conv2d_upsample_block.1} parent=0 // pred_region
    _
  $region5: #{conv2d_upsample_block.1} parent=0 // pred_fallthru
    _
  // Predicated region
  $region6: #{conv2d_upsample_block.1} parent=0 // pred_check
    _
  $region7: #{conv2d_upsample_block.1} parent=0 // pred_check_branch
    %13 = sbr.rel (0) target = $region9
  $region8: #{conv2d_upsample_block.1} parent=0 // pred_region
    _
  $region9: #{conv2d_upsample_block.1} parent=0 // pred_fallthru
    _
  // Predicated region
  $region10: #{conv2d_upsample_block.1} parent=0 // pred_check
    _
  $region11: #{conv2d_upsample_block.1} parent=0 // pred_check_branch
    %15 = sbr.rel (0) target = $region13
  $region12: #{conv2d_upsample_block.1} parent=0 // pred_region
    _
  $region13: #{conv2d_upsample_block.1} parent=0 // pred_fallthru
    _
  // Predicated region
  $region14: #{conv2d_upsample_block.1} parent=0 // pred_check
    _
  $region15: #{conv2d_upsample_block.1} parent=0 // pred_check_branch
    %17 = sbr.rel (0) target = $region17
  $region16: #{conv2d_upsample_block.1} parent=0 // pred_region
    _
  $region17: #{conv2d_upsample_block.1} parent=0 // pred_fallthru
    _
  // Predicated region
  $region18: #{conv2d_upsample_block.1} parent=0 // pred_check
    _
  $region19: #{conv2d_upsample_block.1} parent=0 // pred_check_branch
    %19 = sbr.rel (0) target = $region21
  $region20: #{conv2d_upsample_block.1} parent=0 // pred_region
    _
  $region21: #{conv2d_upsample_block.1} parent=0 // pred_fallthru
    _
  %v21 = vld [vmem:[%s0] sm:$0xff]
  %v22 = vld [vmem:[%s0 + $0x8] sm:$0xff]
  %v23 = vld [vmem:[%s0 + $0x10] sm:$0xff]
  %v24 = vld [vmem:[%s0 + $0x18] sm:$0xff]
  %v25 = vld [vmem:[%s0 + $0x20] sm:$0xff]
  %v26 = vld [vmem:[%s0 + $0x28] sm:$0xff]
  %v27 = vld [vmem:[%s0 + $0x30] sm:$0xff]
  %v28 = vld [vmem:[%s0 + $0x38] sm:$0xff]
  %v29 = vpack.c.bf16 %v23, %v21
  %v30 = vpack.c.bf16 %v24, %v22
  %v31 = vpack.c.bf16 %v27, %v25
  %v32 = vpack.c.bf16 %v28, %v26
  %v33 = vld [vmem:[%s1] sm:$0xf]
  %v34 = vld [vmem:[%s1 + $0x4] sm:$0xf]
  %v35 = vld [vmem:[%s1 + $0x8] sm:$0xf]
  %v36 = vld [vmem:[%s1 + $0xc] sm:$0xf]
  %v37 = vld [vmem:[%s1 + $0x10] sm:$0xf]
  %v38 = vld [vmem:[%s1 + $0x14] sm:$0xf]
  %v39 = vld [vmem:[%s1 + $0x18] sm:$0xf]
  %v40 = vld [vmem:[%s1 + $0x1c] sm:$0xf]
  %v41 = vld [vmem:[%s1 + $0x20] sm:$0xf]
  %v42 = vld [vmem:[%s1 + $0x24] sm:$0xf]
  %v43 = vld [vmem:[%s1 + $0x28] sm:$0xf]
  %v44 = vld [vmem:[%s1 + $0x2c] sm:$0xf]
  %v45 = vld [vmem:[%s1 + $0x30] sm:$0xf]
  %v46 = vld [vmem:[%s1 + $0x34] sm:$0xf]
  %v47 = vld [vmem:[%s1 + $0x38] sm:$0xf]
  %v48 = vld [vmem:[%s1 + $0x3c] sm:$0xf]
  %v49 = vld [vmem:[%s1 + $0x40] sm:$0xf]
  %v50 = vld [vmem:[%s1 + $0x44] sm:$0xf]
  %v51 = vld [vmem:[%s1 + $0x48] sm:$0xf]
  %v52 = vld [vmem:[%s1 + $0x4c] sm:$0xf]
  %v53 = vld [vmem:[%s1 + $0x50] sm:$0xf]
  %v54 = vld [vmem:[%s1 + $0x54] sm:$0xf]
  %v55 = vld [vmem:[%s1 + $0x58] sm:$0xf]
  %v56 = vld [vmem:[%s1 + $0x5c] sm:$0xf]
  %v81 = vunpack.c.l.b16 %v33
  %v82 = vunpack.c.l.b16 %v34
  %v83 = vunpack.c.l.b16 %v35
  %v84 = vunpack.c.l.b16 %v36
  %v85 = vunpack.c.l.b16 %v37
  %v86 = vunpack.c.l.b16 %v38
  %v87 = vunpack.c.l.b16 %v39
  %v88 = vunpack.c.l.b16 %v40
  %v89 = vunpack.c.l.b16 %v41
  %v90 = vunpack.c.l.b16 %v42
  %v91 = vunpack.c.l.b16 %v43
  %v92 = vunpack.c.l.b16 %v44
  %v93 = vunpack.c.l.b16 %v45
  %v94 = vunpack.c.l.b16 %v46
  %v95 = vunpack.c.l.b16 %v47
  %v96 = vunpack.c.l.b16 %v48
  %v97 = vunpack.c.l.b16 %v49
  %v98 = vunpack.c.l.b16 %v50
  %v99 = vunpack.c.l.b16 %v51
  %v100 = vunpack.c.l.b16 %v52
  %v101 = vunpack.c.l.b16 %v53
  %v102 = vunpack.c.l.b16 %v54
  %v103 = vunpack.c.l.b16 %v55
  %v104 = vunpack.c.l.b16 %v56
  %v105 = vpack.c.b16 %v82, %v81
  %v106 = vpack.c.b16 %v84, %v83
  %v107 = vpack.c.b16 %v86, %v85
  %v108 = vpack.c.b16 %v88, %v87
  %v109 = vpack.c.b16 %v90, %v89
  %v110 = vpack.c.b16 %v92, %v91
  %v111 = vpack.c.b16 %v94, %v93
  %v112 = vpack.c.b16 %v96, %v95
  %v113 = vpack.c.b16 %v98, %v97
  %v114 = vpack.c.b16 %v100, %v99
  %v115 = vpack.c.b16 %v102, %v101
  %v116 = vpack.c.b16 %v104, %v103
  %vm129 = vcmask 523264
  %v131 = vsel %vm129, %v30, 0
  %v134 = vsel %vm129, %v32, 0
  %136 = vmatprep.subr.bf16.mxu0 0
  %137 = vmatpush1.bf16.msra.mxu0 %v105
  %138 = vmatprep.subr.bf16.mxu0 0
  %139 = vmatpush1.bf16.msra.mxu0 %v106
  %140 = vmatprep.subr.bf16.mxu0 0
  %141 = vmatpush1.bf16.msra.mxu0 %v107
  %142 = vmatprep.subr.bf16.mxu0 0
  %143 = vmatpush1.bf16.msra.mxu0 %v108
  %144 = vmatprep.subr.bf16.mxu0 0
  %145 = vmatpush1.bf16.msra.mxu0 %v109
  %146 = vmatprep.subr.bf16.mxu0 0
  %147 = vmatpush1.bf16.msra.mxu0 %v110
  %148 = vmatprep.subr.bf16.mxu0 0
  %149 = vmatpush1.bf16.msra.mxu0 %v111
  %150 = vmatprep.subr.bf16.mxu0 0
  %151 = vmatpush1.bf16.msra.mxu0 %v112
  %152 = vmatprep.subr.bf16.mxu0 0
  %153 = vmatpush1.bf16.msra.mxu0 %v113
  %154 = vmatprep.subr.bf16.mxu0 0
  %155 = vmatpush1.bf16.msra.mxu0 %v114
  %156 = vmatprep.subr.bf16.mxu0 0
  %157 = vmatpush1.bf16.msra.mxu0 %v115
  %158 = vmatprep.subr.bf16.mxu0 0
  %159 = vmatpush1.bf16.msra.mxu0 %v116
  %160 = vmatprep.subr.bf16.mxu0 0
  %161 = vmatpush1.bf16.msra.mxu0 0
  %162 = vmatprep.subr.bf16.mxu0 0
  %163 = vmatpush1.bf16.msra.mxu0 0
  %164 = vmatprep.subr.bf16.mxu0 0
  %165 = vmatpush1.bf16.msra.mxu0 0
  %166 = vmatprep.subr.bf16.mxu0 0
  %167 = vmatpush1.bf16.msra.mxu0 0
  %168 = vmatprep.mubr.bf16.mxu0 %v131
  %169 = vmatmul.mubr.bf16.gmra.mrb[0].mxu0 %v29
  %v170 = vpop.f32.mrb[0].mxu0
  %v171 = vadd.f32 0.0, %v170
  %v172 = vpop.f32.mrb[0].mxu0
  %v173 = vpop.f32.mrb[0].mxu0
  %v174 = vadd.f32 0.0, %v173
  %v175 = vpop.f32.mrb[0].mxu0
  %176 = vmatprep.mubr.bf16.mxu0 %v134
  %177 = vmatmul.mubr.bf16.gmra.mrb[0].mxu0 %v31
  %v178 = vpop.f32.mrb[0].mxu0
  %v179 = vadd.f32 0.0, %v178
  %v180 = vpop.f32.mrb[0].mxu0
  %v181 = vpop.f32.mrb[0].mxu0
  %v182 = vadd.f32 0.0, %v181
  %v183 = vpop.f32.mrb[0].mxu0
  %184 = vdwg.mxu0
  %v185 = vld [vmem:[%s3] sm:$0x1]
  %v186 = vld [vmem:[%s3 + $0x1] sm:$0x1]
  %v187 = vsel %vm129, %v171, 0.0
  %v188 = vsel %vm129, %v174, 0.0
  %v189 = vadd.f32 %v187, %v188
  %v190 = vsel %vm129, %v179, 0.0
  %v191 = vadd.f32 %v189, %v190
  %v192 = vsel %vm129, %v182, 0.0
  %v193 = vadd.f32 %v191, %v192
  %v194 = vrot.slane %v193, 4
  %v195 = vadd.f32 %v193, %v194
  %v196 = vrot.slane %v195, 2
  %v197 = vadd.f32 %v195, %v196
  %v198 = vrot.slane %v197, 1
  %v199 = vadd.f32 %v197, %v198
  %201 = vrot.lane.b32.xlu0 %v199, 124
  %v202 = vpop.permute.xlu0 %201
  %204 = vrot.lane.b32.xlu0 %v199, 60
  %v205 = vpop.permute.xlu0 %204
  %vm207 = vcmask 490496
  %v208 = vsel %vm207, %v202, %v205
  %v209 = vadd.f32 %v199, %v208
  %211 = vrot.lane.b32.xlu0 %v209, 120
  %v212 = vpop.permute.xlu0 %211
  %214 = vrot.lane.b32.xlu0 %v209, 56
  %v215 = vpop.permute.xlu0 %214
  %vm217 = vcmask 457728
  %v218 = vsel %vm217, %v212, %v215
  %v219 = vadd.f32 %v209, %v218
  %221 = vrot.lane.b32.xlu0 %v219, 112
  %v222 = vpop.permute.xlu0 %221
  %224 = vrot.lane.b32.xlu0 %v219, 48
  %v225 = vpop.permute.xlu0 %224
  %vm227 = vcmask 392192
  %v228 = vsel %vm227, %v222, %v225
  %v229 = vadd.f32 %v219, %v228
  %231 = vrot.lane.b32.xlu0 %v229, 96
  %v232 = vpop.permute.xlu0 %231
  %234 = vrot.lane.b32.xlu0 %v229, 32
  %v235 = vpop.permute.xlu0 %234
  %vm237 = vcmask 261120
  %v238 = vsel %vm237, %v232, %v235
  %v239 = vadd.f32 %v229, %v238
  %v240 = vmul.f32 %v239, 0.001953125
  %v241 = vlaneseq
  %v242 = vshrl.u32 %v241, 7
  %v243 = vsub.s32 0, %v242
  %v244 = vrot.slane %v240, %v243
  %v245 = vsub.f32 %v171, %v244
  %v246 = vsub.f32 %v174, %v244
  %v247 = vsub.f32 %v179, %v244
  %v248 = vsub.f32 %v182, %v244
  %v249 = vmul.f32 %v245, %v245
  %v250 = vmul.f32 %v246, %v246
  %v251 = vmul.f32 %v247, %v247
  %v252 = vmul.f32 %v248, %v248
  %v253 = vsel %vm129, %v249, 0.0
  %v254 = vsel %vm129, %v250, 0.0
  %v255 = vadd.f32 %v253, %v254
  %v256 = vsel %vm129, %v251, 0.0
  %v257 = vadd.f32 %v255, %v256
  %v258 = vsel %vm129, %v252, 0.0
  %v259 = vadd.f32 %v257, %v258
  %v260 = vrot.slane %v259, 4
  %v261 = vadd.f32 %v259, %v260
  %v262 = vrot.slane %v261, 2
  %v263 = vadd.f32 %v261, %v262
  %v264 = vrot.slane %v263, 1
  %v265 = vadd.f32 %v263, %v264
  %267 = vrot.lane.b32.xlu0 %v265, 124
  %v268 = vpop.permute.xlu0 %267
  %270 = vrot.lane.b32.xlu0 %v265, 60
  %v271 = vpop.permute.xlu0 %270
  %v273 = vsel %vm207, %v268, %v271
  %v274 = vadd.f32 %v265, %v273
  %276 = vrot.lane.b32.xlu0 %v274, 120
  %v277 = vpop.permute.xlu0 %276
  %279 = vrot.lane.b32.xlu0 %v274, 56
  %v280 = vpop.permute.xlu0 %279
  %v282 = vsel %vm217, %v277, %v280
  %v283 = vadd.f32 %v274, %v282
  %285 = vrot.lane.b32.xlu0 %v283, 112
  %v286 = vpop.permute.xlu0 %285
  %288 = vrot.lane.b32.xlu0 %v283, 48
  %v289 = vpop.permute.xlu0 %288
  %v291 = vsel %vm227, %v286, %v289
  %v292 = vadd.f32 %v283, %v291
  %294 = vrot.lane.b32.xlu0 %v292, 96
  %v295 = vpop.permute.xlu0 %294
  %297 = vrot.lane.b32.xlu0 %v292, 32
  %v298 = vpop.permute.xlu0 %297
  %v300 = vsel %vm237, %v295, %v298
  %v301 = vadd.f32 %v292, %v300
  %v302 = vmul.f32 %v301, 0.001953125
  %v303 = vadd.f32 %v302, 1e-05
  %v304 = vrsqrt.pop %v303
  %v305 = vmul.f32 %v185, %v304
  %v306 = vlaneseq
  %v307 = vshrl.u32 %v306, 7
  %v308 = vsub.s32 0, %v307
  %v309 = vrot.slane %v305, %v308
  %v310 = vmul.f32 %v245, %v309
  %v311 = vmul.f32 %v246, %v309
  %v312 = vmul.f32 %v247, %v309
  %v313 = vmul.f32 %v248, %v309
  %v314 = vlaneseq
  %v315 = vshrl.u32 %v314, 7
  %v316 = vsub.s32 0, %v315
  %v317 = vrot.slane %v186, %v316
  %v318 = vadd.f32 %v310, %v317
  %v319 = vadd.f32 %v311, %v317
  %v320 = vadd.f32 %v312, %v317
  %v321 = vadd.f32 %v313, %v317
  %v322 = vxor.u32 %v318, 2147483648
  %v323 = vxor.u32 %v319, 2147483648
  %v324 = vxor.u32 %v320, 2147483648
  %v325 = vxor.u32 %v321, 2147483648
  %v326 = vmul.f32 %v322, 1.442695
  %v327 = vpow.pop %v326
  %v328 = vmul.f32 %v323, 1.442695
  %v329 = vpow.pop %v328
  %v330 = vmul.f32 %v324, 1.442695
  %v331 = vpow.pop %v330
  %v332 = vmul.f32 %v325, 1.442695
  %v333 = vpow.pop %v332
  %v334 = vadd.f32 %v327, 1.0
  %v335 = vadd.f32 %v329, 1.0
  %v336 = vadd.f32 %v331, 1.0
  %v337 = vadd.f32 %v333, 1.0
  %v338 = vrcp.pop %v334
  %v339 = vmul.f32 1.0, %v338
  %v340 = vrcp.pop %v335
  %v341 = vmul.f32 1.0, %v340
  %v342 = vrcp.pop %v336
  %v343 = vmul.f32 1.0, %v342
  %v344 = vrcp.pop %v337
  %v345 = vmul.f32 1.0, %v344
  %v346 = vmul.f32 %v318, %v339
  %v347 = vmul.f32 %v319, %v341
  %v348 = vmul.f32 %v320, %v343
  %v349 = vmul.f32 %v321, %v345
  %354 = vrot.lane.b32.xlu0 %v21, 64
  %v355 = vpop.permute.xlu0 %354
  %356 = vrot.lane.b32.xlu0 %v23, 64
  %v357 = vpop.permute.xlu0 %356
  %358 = vrot.lane.b32.xlu0 %v25, 64
  %v359 = vpop.permute.xlu0 %358
  %360 = vrot.lane.b32.xlu0 %v27, 64
  %v361 = vpop.permute.xlu0 %360
  %v366 = vadd.f32 %v346, %v355
  %v367 = vadd.f32 %v347, %v357
  %v368 = vadd.f32 %v348, %v359
  %v369 = vadd.f32 %v349, %v361
  %v370 = vlaneseq
  %v371 = vshrl.u32 %v370, 7
  %v372 = vadd.s32 %v371, 8
  %v373 = vadd.s32 %v371, 16
  %v374 = vadd.s32 %v371, 24
  %v375 = vand.u32 %v371, 15
  %v376 = vand.u32 %v372, 15
  %v377 = vand.u32 %v373, 15
  %v378 = vand.u32 %v374, 15
  %vm379 = vcmp.ne.s32.totalorder %v375, 0
  %vm380 = vcmp.ne.s32.totalorder %v376, 0
  %vm381 = vcmp.ne.s32.totalorder %v377, 0
  %vm382 = vcmp.ne.s32.totalorder %v378, 0
  %vm387 = vcmask 1040384
  %v388 = vrot.slane %v366, 7
  %v389 = vrot.slane %v367, 7
  %v390 = vsel %vm387, %v388, %v389
  %v391 = vrot.slane %v368, 7
  %v392 = vsel %vm387, %v389, %v391
  %v393 = vrot.slane %v369, 7
  %v394 = vsel %vm387, %v391, %v393
  %v399 = vsel %vm387, 0.0, %v388
  %v400 = vsel %vm379, %v399, 0.0
  %v401 = vsel %vm380, %v390, 0.0
  %v402 = vsel %vm381, %v392, 0.0
  %v403 = vsel %vm382, %v394, 0.0
  %vm404 = vcmp.ne.s32.totalorder %v375, 15
  %vm405 = vcmp.ne.s32.totalorder %v376, 15
  %vm406 = vcmp.ne.s32.totalorder %v377, 15
  %vm407 = vcmp.ne.s32.totalorder %v378, 15
  %vm408 = vcmask 1046528
  %v409 = vrot.slane %v366, 1
  %v410 = vrot.slane %v367, 1
  %v411 = vsel %vm408, %v409, %v410
  %v412 = vrot.slane %v368, 1
  %v413 = vsel %vm408, %v410, %v412
  %v414 = vrot.slane %v369, 1
  %v415 = vsel %vm408, %v412, %v414
  %v420 = vsel %vm408, %v414, 0.0
  %v421 = vsel %vm404, %v411, 0.0
  %v422 = vsel %vm405, %v413, 0.0
  %v423 = vsel %vm406, %v415, 0.0
  %v424 = vsel %vm407, %v420, 0.0
  %425 = vrot.lane.b32.xlu0 %v366, 64
  %v426 = vpop.permute.xlu0 %425
  %427 = vrot.lane.b32.xlu0 %v367, 64
  %v428 = vpop.permute.xlu0 %427
  %429 = vrot.lane.b32.xlu0 %v368, 64
  %v430 = vpop.permute.xlu0 %429
  %431 = vrot.lane.b32.xlu0 %v369, 64
  %v432 = vpop.permute.xlu0 %431
  %v437 = vsel %vm129, %v400, %v426
  %v438 = vsel %vm129, %v401, %v428
  %v439 = vsel %vm129, %v402, %v430
  %v440 = vsel %vm129, %v403, %v432
  %v441 = vpack.c.bf16 %v438, %v437
  %v442 = vpack.c.bf16 %v422, %v421
  %v443 = vpack.c.bf16 %v440, %v439
  %v444 = vpack.c.bf16 %v424, %v423
  %v445 = vld [vmem:[%s2] sm:$0xf]
  %v446 = vld [vmem:[%s2 + $0x4] sm:$0xf]
  %v447 = vld [vmem:[%s2 + $0x8] sm:$0xf]
  %v448 = vld [vmem:[%s2 + $0xc] sm:$0xf]
  %v449 = vld [vmem:[%s2 + $0x10] sm:$0xf]
  %v450 = vld [vmem:[%s2 + $0x14] sm:$0xf]
  %v451 = vld [vmem:[%s2 + $0x18] sm:$0xf]
  %v452 = vld [vmem:[%s2 + $0x1c] sm:$0xf]
  %v453 = vld [vmem:[%s2 + $0x20] sm:$0xf]
  %v454 = vld [vmem:[%s2 + $0x24] sm:$0xf]
  %v455 = vld [vmem:[%s2 + $0x28] sm:$0xf]
  %v456 = vld [vmem:[%s2 + $0x2c] sm:$0xf]
  %v457 = vld [vmem:[%s2 + $0x30] sm:$0xf]
  %v458 = vld [vmem:[%s2 + $0x34] sm:$0xf]
  %v459 = vld [vmem:[%s2 + $0x38] sm:$0xf]
  %v460 = vld [vmem:[%s2 + $0x3c] sm:$0xf]
  %v461 = vld [vmem:[%s2 + $0x40] sm:$0xf]
  %v462 = vld [vmem:[%s2 + $0x44] sm:$0xf]
  %v463 = vld [vmem:[%s2 + $0x48] sm:$0xf]
  %v464 = vld [vmem:[%s2 + $0x4c] sm:$0xf]
  %v465 = vld [vmem:[%s2 + $0x50] sm:$0xf]
  %v466 = vld [vmem:[%s2 + $0x54] sm:$0xf]
  %v467 = vld [vmem:[%s2 + $0x58] sm:$0xf]
  %v468 = vld [vmem:[%s2 + $0x5c] sm:$0xf]
  %v493 = vunpack.c.l.b16 %v445
  %v494 = vunpack.c.l.b16 %v446
  %v495 = vunpack.c.l.b16 %v447
  %v496 = vunpack.c.l.b16 %v448
  %v497 = vunpack.c.l.b16 %v449
  %v498 = vunpack.c.l.b16 %v450
  %v499 = vunpack.c.l.b16 %v451
  %v500 = vunpack.c.l.b16 %v452
  %v501 = vunpack.c.l.b16 %v453
  %v502 = vunpack.c.l.b16 %v454
  %v503 = vunpack.c.l.b16 %v455
  %v504 = vunpack.c.l.b16 %v456
  %v505 = vunpack.c.l.b16 %v457
  %v506 = vunpack.c.l.b16 %v458
  %v507 = vunpack.c.l.b16 %v459
  %v508 = vunpack.c.l.b16 %v460
  %v509 = vunpack.c.l.b16 %v461
  %v510 = vunpack.c.l.b16 %v462
  %v511 = vunpack.c.l.b16 %v463
  %v512 = vunpack.c.l.b16 %v464
  %v513 = vunpack.c.l.b16 %v465
  %v514 = vunpack.c.l.b16 %v466
  %v515 = vunpack.c.l.b16 %v467
  %v516 = vunpack.c.l.b16 %v468
  %v517 = vpack.c.b16 %v494, %v493
  %v518 = vpack.c.b16 %v496, %v495
  %v519 = vpack.c.b16 %v498, %v497
  %v520 = vpack.c.b16 %v500, %v499
  %v521 = vpack.c.b16 %v502, %v501
  %v522 = vpack.c.b16 %v504, %v503
  %v523 = vpack.c.b16 %v506, %v505
  %v524 = vpack.c.b16 %v508, %v507
  %v525 = vpack.c.b16 %v510, %v509
  %v526 = vpack.c.b16 %v512, %v511
  %v527 = vpack.c.b16 %v514, %v513
  %v528 = vpack.c.b16 %v516, %v515
  %v542 = vsel %vm129, %v442, 0
  %v545 = vsel %vm129, %v444, 0
  %547 = vmatprep.subr.bf16.mxu0 0
  %548 = vmatpush1.bf16.msra.mxu0 %v517
  %549 = vmatprep.subr.bf16.mxu0 0
  %550 = vmatpush1.bf16.msra.mxu0 %v518
  %551 = vmatprep.subr.bf16.mxu0 0
  %552 = vmatpush1.bf16.msra.mxu0 %v519
  %553 = vmatprep.subr.bf16.mxu0 0
  %554 = vmatpush1.bf16.msra.mxu0 %v520
  %555 = vmatprep.subr.bf16.mxu0 0
  %556 = vmatpush1.bf16.msra.mxu0 %v521
  %557 = vmatprep.subr.bf16.mxu0 0
  %558 = vmatpush1.bf16.msra.mxu0 %v522
  %559 = vmatprep.subr.bf16.mxu0 0
  %560 = vmatpush1.bf16.msra.mxu0 %v523
  %561 = vmatprep.subr.bf16.mxu0 0
  %562 = vmatpush1.bf16.msra.mxu0 %v524
  %563 = vmatprep.subr.bf16.mxu0 0
  %564 = vmatpush1.bf16.msra.mxu0 %v525
  %565 = vmatprep.subr.bf16.mxu0 0
  %566 = vmatpush1.bf16.msra.mxu0 %v526
  %567 = vmatprep.subr.bf16.mxu0 0
  %568 = vmatpush1.bf16.msra.mxu0 %v527
  %569 = vmatprep.subr.bf16.mxu0 0
  %570 = vmatpush1.bf16.msra.mxu0 %v528
  %571 = vmatprep.subr.bf16.mxu0 0
  %572 = vmatpush1.bf16.msra.mxu0 0
  %573 = vmatprep.subr.bf16.mxu0 0
  %574 = vmatpush1.bf16.msra.mxu0 0
  %575 = vmatprep.subr.bf16.mxu0 0
  %576 = vmatpush1.bf16.msra.mxu0 0
  %577 = vmatprep.subr.bf16.mxu0 0
  %578 = vmatpush1.bf16.msra.mxu0 0
  %579 = vmatprep.mubr.bf16.mxu0 %v542
  %580 = vmatmul.mubr.bf16.gmra.mrb[0].mxu0 %v441
  %v581 = vpop.f32.mrb[0].mxu0
  %v582 = vadd.f32 0.0, %v581
  %v583 = vpop.f32.mrb[0].mxu0
  %v584 = vpop.f32.mrb[0].mxu0
  %v585 = vadd.f32 0.0, %v584
  %v586 = vpop.f32.mrb[0].mxu0
  %587 = vmatprep.mubr.bf16.mxu0 %v545
  %588 = vmatmul.mubr.bf16.gmra.mrb[0].mxu0 %v443
  %v589 = vpop.f32.mrb[0].mxu0
  %v590 = vadd.f32 0.0, %v589
  %v591 = vpop.f32.mrb[0].mxu0
  %v592 = vpop.f32.mrb[0].mxu0
  %v593 = vadd.f32 0.0, %v592
  %v594 = vpop.f32.mrb[0].mxu0
  %595 = vdwg.mxu0
  %v596 = vld [vmem:[%s4] sm:$0x1]
  %v597 = vld [vmem:[%s4 + $0x1] sm:$0x1]
  %v598 = vadd.f32 %v582, %v585
  %v599 = vadd.f32 %v598, %v590
  %v600 = vadd.f32 %v599, %v593
  %v601 = vrot.slane %v600, 4
  %v602 = vadd.f32 %v600, %v601
  %v603 = vrot.slane %v602, 2
  %v604 = vadd.f32 %v602, %v603
  %v605 = vrot.slane %v604, 1
  %v606 = vadd.f32 %v604, %v605
  %608 = vrot.lane.b32.xlu0 %v606, 120
  %v609 = vpop.permute.xlu0 %608
  %v611 = vadd.f32 %v606, %v609
  %613 = vrot.lane.b32.xlu0 %v611, 112
  %v614 = vpop.permute.xlu0 %613
  %v616 = vadd.f32 %v611, %v614
  %618 = vrot.lane.b32.xlu0 %v616, 96
  %v619 = vpop.permute.xlu0 %618
  %v621 = vadd.f32 %v616, %v619
  %623 = vrot.lane.b32.xlu0 %v621, 64
  %v624 = vpop.permute.xlu0 %623
  %v626 = vadd.f32 %v621, %v624
  %v627 = vmul.f32 %v626, 0.001953125
  %v628 = vlaneseq
  %v629 = vshrl.u32 %v628, 7
  %v630 = vsub.s32 0, %v629
  %v631 = vrot.slane %v627, %v630
  %v632 = vsub.f32 %v582, %v631
  %v633 = vsub.f32 %v585, %v631
  %v634 = vsub.f32 %v590, %v631
  %v635 = vsub.f32 %v593, %v631
  %v636 = vmul.f32 %v632, %v632
  %v637 = vmul.f32 %v633, %v633
  %v638 = vmul.f32 %v634, %v634
  %v639 = vmul.f32 %v635, %v635
  %v640 = vadd.f32 %v636, %v637
  %v641 = vadd.f32 %v640, %v638
  %v642 = vadd.f32 %v641, %v639
  %v643 = vrot.slane %v642, 4
  %v644 = vadd.f32 %v642, %v643
  %v645 = vrot.slane %v644, 2
  %v646 = vadd.f32 %v644, %v645
  %v647 = vrot.slane %v646, 1
  %v648 = vadd.f32 %v646, %v647
  %650 = vrot.lane.b32.xlu0 %v648, 120
  %v651 = vpop.permute.xlu0 %650
  %v653 = vadd.f32 %v648, %v651
  %655 = vrot.lane.b32.xlu0 %v653, 112
  %v656 = vpop.permute.xlu0 %655
  %v658 = vadd.f32 %v653, %v656
  %660 = vrot.lane.b32.xlu0 %v658, 96
  %v661 = vpop.permute.xlu0 %660
  %v663 = vadd.f32 %v658, %v661
  %665 = vrot.lane.b32.xlu0 %v663, 64
  %v666 = vpop.permute.xlu0 %665
  %v668 = vadd.f32 %v663, %v666
  %v669 = vmul.f32 %v668, 0.001953125
  %v670 = vadd.f32 %v669, 1e-05
  %v671 = vrsqrt.pop %v670
  %v672 = vmul.f32 %v596, %v671
  %v673 = vlaneseq
  %v674 = vshrl.u32 %v673, 7
  %v675 = vsub.s32 0, %v674
  %v676 = vrot.slane %v672, %v675
  %v677 = vmul.f32 %v632, %v676
  %v678 = vmul.f32 %v633, %v676
  %v679 = vmul.f32 %v634, %v676
  %v680 = vmul.f32 %v635, %v676
  %v681 = vlaneseq
  %v682 = vshrl.u32 %v681, 7
  %v683 = vsub.s32 0, %v682
  %v684 = vrot.slane %v597, %v683
  %v685 = vadd.f32 %v677, %v684
  %v686 = vadd.f32 %v678, %v684
  %v687 = vadd.f32 %v679, %v684
  %v688 = vadd.f32 %v680, %v684
  %v689 = vxor.u32 %v685, 2147483648
  %v690 = vxor.u32 %v686, 2147483648
  %v691 = vxor.u32 %v687, 2147483648
  %v692 = vxor.u32 %v688, 2147483648
  %v693 = vmul.f32 %v689, 1.442695
  %v694 = vpow.pop %v693
  %v695 = vmul.f32 %v690, 1.442695
  %v696 = vpow.pop %v695
  %v697 = vmul.f32 %v691, 1.442695
  %v698 = vpow.pop %v697
  %v699 = vmul.f32 %v692, 1.442695
  %v700 = vpow.pop %v699
  %v701 = vadd.f32 %v694, 1.0
  %v702 = vadd.f32 %v696, 1.0
  %v703 = vadd.f32 %v698, 1.0
  %v704 = vadd.f32 %v700, 1.0
  %v705 = vrcp.pop %v701
  %v706 = vmul.f32 1.0, %v705
  %v707 = vrcp.pop %v702
  %v708 = vmul.f32 1.0, %v707
  %v709 = vrcp.pop %v703
  %v710 = vmul.f32 1.0, %v709
  %v711 = vrcp.pop %v704
  %v712 = vmul.f32 1.0, %v711
  %v713 = vmul.f32 %v685, %v706
  %v714 = vmul.f32 %v686, %v708
  %v715 = vmul.f32 %v687, %v710
  %v716 = vmul.f32 %v688, %v712
  %717 = vst [vmem:[%s5] sm:$0xff] %v713
  %718 = vst [vmem:[%s5 + $0x8] sm:$0xff] %v714
  %719 = vst [vmem:[%s5 + $0x10] sm:$0xff] %v715
  %720 = vst [vmem:[%s5 + $0x18] sm:$0xff] %v716
  // Predicated region
  $region22: #{conv2d_upsample_block.1} parent=0 // pred_check
    _
  $region23: #{conv2d_upsample_block.1} parent=0 // pred_check_branch
    %722 = sbr.rel (0) target = $region25
  $region24: #{conv2d_upsample_block.1} parent=0 // pred_region
    _
  $region25: #{conv2d_upsample_block.1} parent=0 // pred_fallthru
    _
  // Predicated region
  $region26: #{conv2d_upsample_block.1} parent=0 // pred_check
    _
  $region27: #{conv2d_upsample_block.1} parent=0 // pred_check_branch
    %724 = sbr.rel (0) target = $region29
  $region28: #{conv2d_upsample_block.1} parent=0 // pred_region
    _
  $region29: #{conv2d_upsample_block.1} parent=0 // pred_fallthru
    _

</llo_original>
